<compile_context>
chip_gen: v7x
topology: tpu7x:2x2x1
jax: 0.10.0
libtpu: 0.0.40
codegen_flags: <defaults>
</compile_context>

<pallas_src>
import jax
import jax.numpy as jnp
from jax.experimental import pallas as pl
from jax.experimental.pallas import tpu as pltpu


# --------------------------------------------------------------------------
# Kernel 1: attention vector  att = sigmoid(relu(max_L(z) @ W1^T) @ W2^T)
# --------------------------------------------------------------------------
def _att_kernel(z_ref, w1t_ref, w2t_ref, att_ref):
    # z_ref  : (TB, L, Cin)   native dtype (max over L == AdaptiveMaxPool1d(1))
    # w1t_ref: (Cin, HIDDEN)  f32
    # w2t_ref: (HIDDEN, Cout) f32
    # att_ref: (TB, Cout)     f32
    zm = jnp.max(z_ref[...], axis=1).astype(jnp.float32)        # (TB, Cin)
    h = jnp.dot(zm, w1t_ref[...],
                preferred_element_type=jnp.float32)              # (TB, HIDDEN)
    h = jnp.maximum(h, 0.0)
    a = jnp.dot(h, w2t_ref[...],
                preferred_element_type=jnp.float32)              # (TB, Cout)
    att_ref[...] = 1.0 / (1.0 + jnp.exp(-a))                     # exp -> EUP


# --------------------------------------------------------------------------
# Kernel 2: multiply-only, lane-dense scaling of x by the attention column
# --------------------------------------------------------------------------
def _scale_kernel(x_ref, att_ref, out_ref):
    # x_ref  : (TR, TL)  native dtype
    # att_ref: (TR, 1)   float32
    # out_ref: (TR, TL)  native dtype
    out_ref[...] = (x_ref[...] * att_ref[...]).astype(out_ref.dtype)


def _target_tile_bytes():
    """Per-generation x-tile target (bytes)."""
    try:
        cap = getattr(pltpu.get_tpu_info(), "vmem_capacity_bytes", 64 << 20)
    except Exception:
        cap = 64 << 20
    # ~4 MiB tiles already push the mem-bound stream to ~85-90% of roofline on
    # v7x (64 MiB VMEM); 128 MiB parts (v5e/v6e) get a little more headroom.
    return (6 << 20) if cap >= (128 << 20) else (4 << 20)


def _choose_tiles(rows, hw, itemsize, target_bytes):
    """Pick (row_tile, lane_tile) for the (rows, hw) view of x."""
    LANE, SUB = 128, 8
    # Lane tile: full HW when it fits an 8-row slab within budget (full-extent
    # blocks have no 128-divisibility requirement); else a multiple of 128.
    max_lane = max(LANE, (target_bytes // (SUB * itemsize)) // LANE * LANE)
    if hw <= max_lane or hw % LANE != 0:
        tl = hw
    else:
        tl = max_lane
    # Row tile: fill the remaining budget in multiples of 8.
    tr = max(SUB, (target_bytes // max(1, tl * itemsize)) // SUB * SUB)
    if rows <= tr:
        tr = rows           # full extent -> no sublane-divisibility constraint
    return tr, tl


def _scale_vmem_limit(tr, tl, itemsize):
    """Explicit VMEM budget: double-buffered in + out tiles plus the
    128-lane-padded (TR, 1) f32 att column, with headroom."""
    x_tile = tr * tl * itemsize
    att_tile = tr * 128 * 4                      # lane dim pads 1 -> 128
    total = 2 * (2 * x_tile + att_tile)          # in + out + att, double-buffered
    return int(min(max(total + (4 << 20), 16 << 20), 96 << 20))


def pfd_forward(x, z, w1, w2, *, donate_x=False):
    """x: (B, Cout, H, W) or (B, T, Cout, H, W); z: (B[, T], L, Cin) with a
    matching flattened batch.  w1: (HIDDEN, Cin), w2: (Cout, HIDDEN) — the two
    1x1 Conv1d weights with the kernel dim squeezed (bias=False).
    donate_x=True aliases x's HBM buffer for the output (only if x is dead)."""
    time_series = (x.ndim == 5)
    if time_series:
        B, T = x.shape[:2]
        x = x.reshape((B * T,) + x.shape[2:])
    if z.ndim != 3:
        z = z.reshape((z.shape[0] * z.shape[1],) + z.shape[2:])

    Bx, Cout, H, W = x.shape
    Bz, L, Cin = z.shape
    assert Bz == Bx, (
        f"batch mismatch after flattening: x batch {Bx} vs z batch {Bz}")
    HIDDEN = w1.shape[0]
    HW = H * W

    # ---- attention vector (tiny; off the x-streaming path) -----------------
    w1t = jnp.transpose(w1).astype(jnp.float32)               # (Cin, HIDDEN)
    w2t = jnp.transpose(w2).astype(jnp.float32)               # (HIDDEN, Cout)

    TBA = Bx if Bx <= 256 else 256                            # 256 % 8 == 0
    att = pl.pallas_call(
        _att_kernel,
        out_shape=jax.ShapeDtypeStruct((Bx, Cout), jnp.float32),
        grid_spec=pltpu.PrefetchScalarGridSpec(
            num_scalar_prefetch=0,
            grid=(pl.cdiv(Bx, TBA),),
            in_specs=[
                pl.BlockSpec((TBA, L, Cin), lambda b: (b, 0, 0)),
                pl.BlockSpec((Cin, HIDDEN), lambda b: (0, 0)),
                pl.BlockSpec((HIDDEN, Cout), lambda b: (0, 0)),
            ],
            out_specs=pl.BlockSpec((TBA, Cout), lambda b: (b, 0)),
        ),
        compiler_params=pltpu.CompilerParams(
            dimension_semantics=("parallel",)),
    )(z, w1t, w2t)

    # ---- lane-dense multiply over x (native dtype, no up-cast) -------------
    rows = Bx * Cout
    x2d = x.reshape(rows, HW)                                 # contiguous reshape
    att_col = att.reshape(rows, 1)                            # (B*Cout, 1)

    itemsize = jnp.dtype(x.dtype).itemsize
    tr, tl = _choose_tiles(rows, HW, itemsize, _target_tile_bytes())

    out2d = pl.pallas_call(
        _scale_kernel,
        out_shape=jax.ShapeDtypeStruct((rows, HW), x.dtype),
        grid_spec=pltpu.PrefetchScalarGridSpec(
            num_scalar_prefetch=0,
            grid=(pl.cdiv(rows, tr), pl.cdiv(HW, tl)),
            in_specs=[
                pl.BlockSpec((tr, tl), lambda r, c: (r, c)),
                pl.BlockSpec((tr, 1), lambda r, c: (r, 0)),
            ],
            out_specs=pl.BlockSpec((tr, tl), lambda r, c: (r, c)),
        ),
        compiler_params=pltpu.CompilerParams(
            dimension_semantics=("parallel", "parallel"),
            vmem_limit_bytes=_scale_vmem_limit(tr, tl, itemsize)),
        input_output_aliases=({0: 0} if donate_x else {}),
    )(x2d, att_col)

    out = out2d.reshape(Bx, Cout, H, W)
    if time_series:
        out = out.reshape(B, T, Cout, H, W)
    return out


def _pfd_reference(x, z, w1, w2):
    """Pure-JAX reference mirroring the PyTorch forward."""
    time_series = (x.ndim == 5)
    if time_series:
        B, T = x.shape[:2]
        x = x.reshape((B * T,) + x.shape[2:])
    if z.ndim != 3:
        z = z.reshape((z.shape[0] * z.shape[1],) + z.shape[2:])
    zm = jnp.max(z.astype(jnp.float32), axis=1)               # (B, Cin)
    h = jnp.maximum(zm @ w1.T.astype(jnp.float32), 0.0)       # (B, HIDDEN)
    att = 1.0 / (1.0 + jnp.exp(-(h @ w2.T.astype(jnp.float32))))
    out = (x.astype(jnp.float32) * att[:, :, None, None]).astype(x.dtype)
    if time_series:
        out = out.reshape((B, T) + out.shape[1:])
    return out


if __name__ == "__main__":
    key = jax.random.PRNGKey(0)
    kx, kz, kw1, kw2, kx5, kz4 = jax.random.split(key, 6)

    B, Cin, Cout, H, W, L = 2, 4, 4, 16, 16, 8
    HIDDEN = 256

    # Deterministic synthetic weights for the two 1x1 Conv1d layers (bias=False).
    w1 = 0.1 * jax.random.normal(kw1, (HIDDEN, Cin), dtype=jnp.float32)
    w2 = 0.1 * jax.random.normal(kw2, (Cout, HIDDEN), dtype=jnp.float32)

    # ---- single-frame path (4-D x) ----
    x = jax.random.normal(kx, (B, Cout, H, W), dtype=jnp.float32)
    z = jax.random.normal(kz, (B, L, Cin), dtype=jnp.float32)
    out = jax.block_until_ready(pfd_forward(x, z, w1, w2))
    ref = _pfd_reference(x, z, w1, w2)
    assert out.shape == (B, Cout, H, W)
    assert jnp.allclose(out, ref, atol=1e-5, rtol=1e-5), "mismatch (4-D path)"

    # ---- time-series path (5-D x, 4-D z) ----
    T = 3
    x5 = jax.random.normal(kx5, (B, T, Cout, H, W), dtype=jnp.float32)
    z4 = jax.random.normal(kz4, (B, T, L, Cin), dtype=jnp.float32)
    out5 = jax.block_until_ready(pfd_forward(x5, z4, w1, w2))
    ref5 = _pfd_reference(x5, z4, w1, w2)
    assert out5.shape == (B, T, Cout, H, W)
    assert jnp.allclose(out5, ref5, atol=1e-5, rtol=1e-5), "mismatch (5-D path)"

    print("KERNEL_OK")
</pallas_src>

<mosaic_0001>
module attributes {stable_mosaic.version = 11 : i64} {
  func.func @_att_kernel(%arg0: i32, %arg1: memref<2x8x4xf32, #tpu.memory_space<vmem>>, %arg2: memref<4x256xf32, #tpu.memory_space<vmem>>, %arg3: memref<256x4xf32, #tpu.memory_space<vmem>>, %arg4: memref<2x4xf32, #tpu.memory_space<vmem>>) attributes {dimension_semantics = [#tpu.dimension_semantics<parallel>], iteration_bounds = array<i64: 1>, scalar_prefetch = 0 : i64, scratch_operands = 0 : i64, tpu.core_type = #tpu.core_type<tc>, window_params = [{transform_indices = @transform_0, window_bounds = array<i64: 2, 8, 4>}, {pipeline_mode = #tpu.pipeline_mode<synchronous>, transform_indices = @transform_1, window_bounds = array<i64: 4, 256>}, {pipeline_mode = #tpu.pipeline_mode<synchronous>, transform_indices = @transform_2, window_bounds = array<i64: 256, 4>}, {transform_indices = @transform_3, window_bounds = array<i64: 2, 4>}]} {
    %c0 = arith.constant 0 : index
    %c0_0 = arith.constant 0 : index
    %c0_1 = arith.constant 0 : index
    %0 = vector.load %arg1[%c0, %c0_0, %c0_1] : memref<2x8x4xf32, #tpu.memory_space<vmem>>, vector<2x8x4xf32>
    %cst = arith.constant dense<0xFF800000> : vector<2x4xf32>
    %1 = vector.multi_reduction <maximumf>, %0, %cst [1] : vector<2x8x4xf32> to vector<2x4xf32>
    %c0_2 = arith.constant 0 : index
    %c0_3 = arith.constant 0 : index
    %2 = vector.load %arg2[%c0_2, %c0_3] : memref<4x256xf32, #tpu.memory_space<vmem>>, vector<4x256xf32>
    %cst_4 = arith.constant dense<0.000000e+00> : vector<2x256xf32>
    %3 = tpu.matmul %1, %2, %cst_4 {dimension_numbers = #tpu.dot_dimension_numbers<[1], [0], [0], [1], [0, 0, 1, 1], [], []>} : vector<2x4xf32>, vector<4x256xf32>, vector<2x256xf32> -> vector<2x256xf32>
    %cst_5 = arith.constant 0.000000e+00 : f32
    %4 = vector.broadcast %cst_5 : f32 to vector<2x256xf32>
    %5 = arith.maximumf %3, %4 : vector<2x256xf32>
    %c0_6 = arith.constant 0 : index
    %c0_7 = arith.constant 0 : index
    %6 = vector.load %arg3[%c0_6, %c0_7] : memref<256x4xf32, #tpu.memory_space<vmem>>, vector<256x4xf32>
    %cst_8 = arith.constant dense<0.000000e+00> : vector<2x4xf32>
    %7 = tpu.matmul %5, %6, %cst_8 {dimension_numbers = #tpu.dot_dimension_numbers<[1], [0], [0], [1], [0, 0, 1, 1], [], []>} : vector<2x256xf32>, vector<256x4xf32>, vector<2x4xf32> -> vector<2x4xf32>
    %cst_9 = arith.constant 0.000000e+00 : f32
    %8 = vector.broadcast %cst_9 : f32 to vector<2x4xf32>
    %9 = arith.subf %8, %7 : vector<2x4xf32>
    %10 = math.exp %9 : vector<2x4xf32>
    %cst_10 = arith.constant 1.000000e+00 : f32
    %11 = vector.broadcast %cst_10 : f32 to vector<2x4xf32>
    %12 = arith.addf %11, %10 : vector<2x4xf32>
    %cst_11 = arith.constant 1.000000e+00 : f32
    %13 = vector.broadcast %cst_11 : f32 to vector<2x4xf32>
    %14 = arith.divf %13, %12 : vector<2x4xf32>
    %c0_12 = arith.constant 0 : index
    %c0_13 = arith.constant 0 : index
    %15 = vector.load %arg4[%c0_12, %c0_13] : memref<2x4xf32, #tpu.memory_space<vmem>>, vector<2x4xf32>
    tpu.vector_store %arg4[%c0_12, %c0_13], %14 {strides = array<i32>} : memref<2x4xf32, #tpu.memory_space<vmem>>, vector<2x4xf32>,
    return
  }
  func.func @transform_0(%arg0: i32) -> (i32, i32, i32) {
    %c0_i32 = arith.constant 0 : i32
    %c0_i32_0 = arith.constant 0 : i32
    %c0_i32_1 = arith.constant 0 : i32
    return %arg0, %c0_i32, %c0_i32_0 : i32, i32, i32
  }
  func.func @transform_1(%arg0: i32) -> (i32, i32) {
    %c0_i32 = arith.constant 0 : i32
    %c0_i32_0 = arith.constant 0 : i32
    %c0_i32_1 = arith.constant 0 : i32
    return %c0_i32, %c0_i32_0 : i32, i32
  }
  func.func @transform_2(%arg0: i32) -> (i32, i32) {
    %c0_i32 = arith.constant 0 : i32
    %c0_i32_0 = arith.constant 0 : i32
    %c0_i32_1 = arith.constant 0 : i32
    return %c0_i32, %c0_i32_0 : i32, i32
  }
  func.func @transform_3(%arg0: i32) -> (i32, i32) {
    %c0_i32 = arith.constant 0 : i32
    %c0_i32_0 = arith.constant 0 : i32
    return %arg0, %c0_i32 : i32, i32
  }
}

</mosaic_0001>

<llo_original>
// kernel: tpu_custom_call.1
$region0: #{tpu_custom_call.1}
  #allocation0 [shape = 'u32[]', space=smem, size = 0x4, offset = 0x4, fixed_abs, tag = 'smem constant byte address 0x4 - core index']
  #allocation1 [shape = 'u32[144,128]{1,0:T(1,128)}', space=vmem, size = 0x12000, scoped, tag = 'internal scratch']
  %s0 = inlined_call_operand.vmem [shape: f32[2,8,4], index: 0, kind: input, shape index: {}]
  %s1 = inlined_call_operand.vmem [shape: f32[4,256], index: 1, kind: input, shape index: {}]
  %s2 = inlined_call_operand.vmem [shape: f32[256,4], index: 2, kind: input, shape index: {}]
  %s3 = inlined_call_operand.hbm [shape: f32[2,4], index: 3, kind: output, shape index: {}]
  %s4 = sld [smem:[#allocation0]]
  $region22: #{tpu_custom_call.1} parent=0
    _
  %s6 = ssub.s32 1, %s4
  %s7 = scalar_select 0, %s6, %s4
  $region1: #{tpu_custom_call.1} parent=0
    #allocation2 [shape = 'u8[1024]{0}', space=vmem, size = 0x400, scoped, tag = 'output window, operand 0, single buffered']
    #allocation3 [shape = 's32[1]{0}', space=sflag, size = 0x4, scoped, tag = 'scoped memory for tpu_custom_call.1']
    %8 = vsyncpa [#allocation3], 0
    // Predicated region
    $region2: #{tpu_custom_call.1} parent=1 // pred_check
      _
    $region3: #{tpu_custom_call.1} parent=1 // pred_check_branch
      %10 = sbr.rel (0) target = $region5
    $region4: #{tpu_custom_call.1} parent=1 // pred_region
      _
    $region5: #{tpu_custom_call.1} parent=1 // pred_fallthru
      _
    // Predicated region
    $region6: #{tpu_custom_call.1} parent=1 // pred_check
      _
    $region7: #{tpu_custom_call.1} parent=1 // pred_check_branch
      %12 = sbr.rel (0) target = $region9
    $region8: #{tpu_custom_call.1} parent=1 // pred_region
      _
    $region9: #{tpu_custom_call.1} parent=1 // pred_fallthru
      _
    // Predicated region
    $region10: #{tpu_custom_call.1} parent=1 // pred_check
      _
    $region11: #{tpu_custom_call.1} parent=1 // pred_check_branch
      %14 = sbr.rel (0) target = $region13
    $region12: #{tpu_custom_call.1} parent=1 // pred_region
      _
    $region13: #{tpu_custom_call.1} parent=1 // pred_fallthru
      _
    %v15 = vld [vmem:[%s0] sm:$0xff]
    %v16 = vld [vmem:[%s0 + $0x8] sm:$0xff]
    %vm17 = vcmask 31744
    %v18 = vsel %vm17, %v15, -inf
    %v19 = vrot.slane %v18, 4
    %v20 = vmax.f32 %v18, %v19
    %v21 = vrot.slane %v20, 2
    %v22 = vmax.f32 %v20, %v21
    %v23 = vrot.slane %v22, 1
    %v24 = vmax.f32 %v22, %v23
    %v25 = vsel %vm17, %v16, -inf
    %v26 = vrot.slane %v25, 4
    %v27 = vmax.f32 %v25, %v26
    %v28 = vrot.slane %v27, 2
    %v29 = vmax.f32 %v27, %v28
    %v30 = vrot.slane %v29, 1
    %v31 = vmax.f32 %v29, %v30
    %v32 = vld [vmem:[%s1] sm:$0xff]
    %vm35 = vcmask 1041409
    %v36 = vsel %vm35, %v31, %v24
    %v38 = vcombine.high %v32, %v32
    %v39 = vsel %vm17, %v36, 0
    %vm41 = vcmask 1043456
    %v42 = vsel %vm41, %v32, 0
    %v44 = vsel %vm41, %v38, 0
    %46 = vmatprep.subr.mxu0 %v44
    %47 = vmatpush1.msra.mxu0 %v42
    %48 = vmatprep.subr.mxu0 0.0
    %49 = vmatpush1.msra.mxu0 0.0
    %50 = vmatprep.subr.mxu0 0.0
    %51 = vmatpush1.msra.mxu0 0.0
    %52 = vmatprep.subr.mxu0 0.0
    %53 = vmatpush1.msra.mxu0 0.0
    %54 = vmatprep.subr.mxu0 0.0
    %55 = vmatpush1.msra.mxu0 0.0
    %56 = vmatprep.subr.mxu0 0.0
    %57 = vmatpush1.msra.mxu0 0.0
    %58 = vmatprep.subr.mxu0 0.0
    %59 = vmatpush1.msra.mxu0 0.0
    %60 = vmatprep.subr.mxu0 0.0
    %61 = vmatpush1.msra.mxu0 0.0
    %62 = vmatprep.subr.mxu0 0.0
    %63 = vmatpush1.msra.mxu0 0.0
    %64 = vmatprep.subr.mxu0 0.0
    %65 = vmatpush1.msra.mxu0 0.0
    %66 = vmatprep.subr.mxu0 0.0
    %67 = vmatpush1.msra.mxu0 0.0
    %68 = vmatprep.subr.mxu0 0.0
    %69 = vmatpush1.msra.mxu0 0.0
    %70 = vmatprep.subr.mxu0 0.0
    %71 = vmatpush1.msra.mxu0 0.0
    %72 = vmatprep.subr.mxu0 0.0
    %73 = vmatpush1.msra.mxu0 0.0
    %74 = vmatprep.subr.mxu0 0.0
    %75 = vmatpush1.msra.mxu0 0.0
    %76 = vmatprep.subr.mxu0 0.0
    %77 = vmatpush1.msra.mxu0 0.0
    %78 = vmatprep.subr.mxu0 0.0
    %79 = vmatpush1.msra.mxu0 0.0
    %80 = vmatprep.subr.mxu0 0.0
    %81 = vmatpush1.msra.mxu0 0.0
    %82 = vmatprep.subr.mxu0 0.0
    %83 = vmatpush1.msra.mxu0 0.0
    %84 = vmatprep.subr.mxu0 0.0
    %85 = vmatpush1.msra.mxu0 0.0
    %86 = vmatprep.subr.mxu0 0.0
    %87 = vmatpush1.msra.mxu0 0.0
    %88 = vmatprep.subr.mxu0 0.0
    %89 = vmatpush1.msra.mxu0 0.0
    %90 = vmatprep.subr.mxu0 0.0
    %91 = vmatpush1.msra.mxu0 0.0
    %92 = vmatprep.subr.mxu0 0.0
    %93 = vmatpush1.msra.mxu0 0.0
    %94 = vmatprep.subr.mxu0 0.0
    %95 = vmatpush1.msra.mxu0 0.0
    %96 = vmatprep.subr.mxu0 0.0
    %97 = vmatpush1.msra.mxu0 0.0
    %98 = vmatprep.subr.mxu0 0.0
    %99 = vmatpush1.msra.mxu0 0.0
    %100 = vmatprep.subr.mxu0 0.0
    %101 = vmatpush1.msra.mxu0 0.0
    %102 = vmatprep.subr.mxu0 0.0
    %103 = vmatpush1.msra.mxu0 0.0
    %104 = vmatprep.subr.mxu0 0.0
    %105 = vmatpush1.msra.mxu0 0.0
    %106 = vmatprep.subr.mxu0 0.0
    %107 = vmatpush1.msra.mxu0 0.0
    %108 = vmatprep.subr.mxu0 0.0
    %109 = vmatpush1.msra.mxu0 0.0
    %110 = vmatprep.mubr.f32.mxu0 0.0
    %111 = vmatmul.mubr.f32.gmra.mrb[0].mxu0 %v39
    %v112 = vpop.f32.mrb[0].mxu0
    %v113 = vadd.f32 0.0, %v112
    %v114 = vpop.f32.mrb[0].mxu0
    %v115 = vadd.f32 0.0, %v114
    %116 = vdwg.mxu0
    %v117 = vmax.f32 %v113, 0.0
    %v118 = vmax.f32 %v115, 0.0
    %v119 = vld [vmem:[%s2] sm:$0xff]
    %v120 = vld [vmem:[%s2 + $0x8] sm:$0xff]
    %v121 = vld [vmem:[%s2 + $0x10] sm:$0xff]
    %v122 = vld [vmem:[%s2 + $0x18] sm:$0xff]
    %v123 = vld [vmem:[%s2 + $0x20] sm:$0xff]
    %v124 = vld [vmem:[%s2 + $0x28] sm:$0xff]
    %v125 = vld [vmem:[%s2 + $0x30] sm:$0xff]
    %v126 = vld [vmem:[%s2 + $0x38] sm:$0xff]
    %v127 = vld [vmem:[%s2 + $0x40] sm:$0xff]
    %v128 = vld [vmem:[%s2 + $0x48] sm:$0xff]
    %v129 = vld [vmem:[%s2 + $0x50] sm:$0xff]
    %v130 = vld [vmem:[%s2 + $0x58] sm:$0xff]
    %v131 = vld [vmem:[%s2 + $0x60] sm:$0xff]
    %v132 = vld [vmem:[%s2 + $0x68] sm:$0xff]
    %v133 = vld [vmem:[%s2 + $0x70] sm:$0xff]
    %v134 = vld [vmem:[%s2 + $0x78] sm:$0xff]
    %v135 = vld [vmem:[%s2 + $0x80] sm:$0xff]
    %v136 = vld [vmem:[%s2 + $0x88] sm:$0xff]
    %v137 = vld [vmem:[%s2 + $0x90] sm:$0xff]
    %v138 = vld [vmem:[%s2 + $0x98] sm:$0xff]
    %v139 = vld [vmem:[%s2 + $0xa0] sm:$0xff]
    %v140 = vld [vmem:[%s2 + $0xa8] sm:$0xff]
    %v141 = vld [vmem:[%s2 + $0xb0] sm:$0xff]
    %v142 = vld [vmem:[%s2 + $0xb8] sm:$0xff]
    %v143 = vld [vmem:[%s2 + $0xc0] sm:$0xff]
    %v144 = vld [vmem:[%s2 + $0xc8] sm:$0xff]
    %v145 = vld [vmem:[%s2 + $0xd0] sm:$0xff]
    %v146 = vld [vmem:[%s2 + $0xd8] sm:$0xff]
    %v147 = vld [vmem:[%s2 + $0xe0] sm:$0xff]
    %v148 = vld [vmem:[%s2 + $0xe8] sm:$0xff]
    %v149 = vld [vmem:[%s2 + $0xf0] sm:$0xff]
    %v150 = vld [vmem:[%s2 + $0xf8] sm:$0xff]
    %151 = vmatprep.subr.mxu0 0.0
    %152 = vmatpush1.msra.mxu0 %v119
    %153 = vmatprep.subr.mxu0 0.0
    %154 = vmatpush1.msra.mxu0 %v120
    %155 = vmatprep.subr.mxu0 0.0
    %156 = vmatpush1.msra.mxu0 %v121
    %157 = vmatprep.subr.mxu0 0.0
    %158 = vmatpush1.msra.mxu0 %v122
    %159 = vmatprep.subr.mxu0 0.0
    %160 = vmatpush1.msra.mxu0 %v123
    %161 = vmatprep.subr.mxu0 0.0
    %162 = vmatpush1.msra.mxu0 %v124
    %163 = vmatprep.subr.mxu0 0.0
    %164 = vmatpush1.msra.mxu0 %v125
    %165 = vmatprep.subr.mxu0 0.0
    %166 = vmatpush1.msra.mxu0 %v126
    %167 = vmatprep.subr.mxu0 0.0
    %168 = vmatpush1.msra.mxu0 %v127
    %169 = vmatprep.subr.mxu0 0.0
    %170 = vmatpush1.msra.mxu0 %v128
    %171 = vmatprep.subr.mxu0 0.0
    %172 = vmatpush1.msra.mxu0 %v129
    %173 = vmatprep.subr.mxu0 0.0
    %174 = vmatpush1.msra.mxu0 %v130
    %175 = vmatprep.subr.mxu0 0.0
    %176 = vmatpush1.msra.mxu0 %v131
    %177 = vmatprep.subr.mxu0 0.0
    %178 = vmatpush1.msra.mxu0 %v132
    %179 = vmatprep.subr.mxu0 0.0
    %180 = vmatpush1.msra.mxu0 %v133
    %181 = vmatprep.subr.mxu0 0.0
    %182 = vmatpush1.msra.mxu0 %v134
    %183 = vmatprep.subr.mxu0 0.0
    %184 = vmatpush1.msra.mxu0 %v135
    %185 = vmatprep.subr.mxu0 0.0
    %186 = vmatpush1.msra.mxu0 %v136
    %187 = vmatprep.subr.mxu0 0.0
    %188 = vmatpush1.msra.mxu0 %v137
    %189 = vmatprep.subr.mxu0 0.0
    %190 = vmatpush1.msra.mxu0 %v138
    %191 = vmatprep.subr.mxu0 0.0
    %192 = vmatpush1.msra.mxu0 %v139
    %193 = vmatprep.subr.mxu0 0.0
    %194 = vmatpush1.msra.mxu0 %v140
    %195 = vmatprep.subr.mxu0 0.0
    %196 = vmatpush1.msra.mxu0 %v141
    %197 = vmatprep.subr.mxu0 0.0
    %198 = vmatpush1.msra.mxu0 %v142
    %199 = vmatprep.subr.mxu0 0.0
    %200 = vmatpush1.msra.mxu0 %v143
    %201 = vmatprep.subr.mxu0 0.0
    %202 = vmatpush1.msra.mxu0 %v144
    %203 = vmatprep.subr.mxu0 0.0
    %204 = vmatpush1.msra.mxu0 %v145
    %205 = vmatprep.subr.mxu0 0.0
    %206 = vmatpush1.msra.mxu0 %v146
    %207 = vmatprep.subr.mxu0 0.0
    %208 = vmatpush1.msra.mxu0 %v147
    %209 = vmatprep.subr.mxu0 0.0
    %210 = vmatpush1.msra.mxu0 %v148
    %211 = vmatprep.subr.mxu0 0.0
    %212 = vmatpush1.msra.mxu0 %v149
    %213 = vmatprep.subr.mxu0 0.0
    %214 = vmatpush1.msra.mxu0 %v150
    %215 = vmatprep.mubr.f32.mxu0 %v118
    %216 = vmatmul.mubr.f32.gmra.mrb[0].mxu0 %v117
    %v217 = vpop.f32.mrb[0].mxu0
    %v218 = vadd.f32 0.0, %v217
    %v219 = vpop.f32.mrb[0].mxu0
    %220 = vdwg.mxu0
    %v221 = vsub.f32 0.0, %v218
    %v222 = vmul.f32 %v221, 1.442695
    %v223 = vpow.pop %v222
    %v224 = vadd.f32 %v223, 1.0
    %v225 = vrcp.pop %v224
    %v226 = vmul.f32 1.0, %v225
    %vm227 = vcmask 25600
    %228 = vst.msk [vmem:[#allocation2] sm:$0x3] %vm227, %v226
    // Predicated region
    $region14: #{tpu_custom_call.1} parent=1 // pred_check
      _
    $region15: #{tpu_custom_call.1} parent=1 // pred_check_branch
      %230 = sbr.rel (0) target = $region17
    $region16: #{tpu_custom_call.1} parent=1 // pred_region
      %s232 = ssub.s32 32, 32
      %233 = vsyncadd [#allocation3], %s232
      %s235 = sshll.u32 [#allocation2], 4
      %s236 = int_to_ptr.vmem [resolvable:$true] %s235
      %238 = dma.vmem_to_hbm [thread:$0]  %s236, 32, %s3, [#allocation3]
    $region17: #{tpu_custom_call.1} parent=1 // pred_fallthru
      _
    // Predicated region
    $region18: #{tpu_custom_call.1} parent=1 // pred_check
      _
    $region19: #{tpu_custom_call.1} parent=1 // pred_check_branch
      %240 = sbr.rel (0) target = $region21
    $region20: #{tpu_custom_call.1} parent=1 // pred_region
      %241 = dma.done [#allocation3], 32
    $region21: #{tpu_custom_call.1} parent=1 // pred_fallthru
      _
    %242 = vsyncpa [#allocation3], 1

</llo_original>
